<compile_context>
chip_gen: v7x
topology: tpu7x:2x2x1
jax: 0.10.0
libtpu: 0.0.40
codegen_flags: <defaults>
</compile_context>

<pallas_src>
import functools

import jax
import jax.numpy as jnp
from jax.experimental import pallas as pl
from jax.experimental.pallas import tpu as pltpu


def _apply_activation(h, activation):
    if activation == "relu":
        return jnp.maximum(h, 0)
    if activation == "gelu":
        # torch.nn.GELU defaults to exact erf (jax.nn.gelu defaults to tanh) --
        # be explicit for parity with the PyTorch module.
        return jax.nn.gelu(h, approximate=False)
    if activation == "tanh":
        return jnp.tanh(h)
    return h  # "none" / identity


def _embedder_kernel(x_ref, w_ref, b_ref, o_ref, *, depth, activation, compute_dtype):
    """Fused MLP embedder tile: depth x (matmul + bias + activation).

    x_ref: (TILE_M, dim)      VMEM, native input dtype (cast to bf16 in-kernel)
    w_ref: (depth, dim, dim)  VMEM, compute dtype, single-buffered & resident
    b_ref: (depth, 1, dim)    VMEM, f32,           single-buffered & resident
    o_ref: (TILE_M, dim)      VMEM, output dtype
    """
    h = x_ref[...].astype(compute_dtype)      # in-kernel cast, hidden under DMA
    for layer in range(depth):                 # static unroll
        acc = jnp.dot(h, w_ref[layer], preferred_element_type=jnp.float32)
        acc = acc + b_ref[layer]               # f32 bias add
        last = layer + 1 == depth
        if last:
            h = _apply_activation(acc, activation)          # final epilogue in f32
        elif activation == "relu":
            # relu commutes with round-to-bf16 -> downcast first, relu on half-width data.
            h = jnp.maximum(acc.astype(compute_dtype), 0)
        else:
            h = _apply_activation(acc, activation).astype(compute_dtype)
    o_ref[...] = h.astype(o_ref.dtype)


def _round_up(n, m):
    return ((n + m - 1) // m) * m


def _vmem_cap_bytes():
    """~75% of physical per-core VMEM: ~48 MiB on v7x, ~96 MiB on v5e/v6e."""
    phys = 128 * 1024 * 1024
    try:
        phys = pltpu.get_tpu_info().vmem_capacity_bytes
    except Exception:  # interpret mode / unexpected backend
        pass
    return int(phys) * 3 // 4


def _vmem_budget(tile_m, dim, depth, x_itemsize, out_itemsize, compute_itemsize):
    x_tiles = 2 * tile_m * dim * x_itemsize            # double-buffered input tile
    out_tiles = 2 * tile_m * dim * out_itemsize        # double-buffered output tile
    weights = depth * dim * dim * compute_itemsize     # single-buffered (Buffered(1))
    biases = depth * dim * 4
    temps = tile_m * dim * (4 + 4 + compute_itemsize)  # live f32 acc + next-layer h + epilogue
    return x_tiles + out_tiles + weights + biases + temps


def _select_tile_m(rows, dim, depth, cap_bytes, x_itemsize, out_itemsize, compute_itemsize):
    # Bigger tiles at small dim (per-grid-step overhead ~0.35 us dominates there).
    if dim <= 256:
        tm = 4096
    elif dim <= 512:
        tm = 2048
    elif dim <= 1024:
        tm = 1024
    else:
        tm = 512
    tm = max(8, min(tm, _round_up(rows, 8)))
    # Shrink until the working set fits under the per-generation VMEM cap.
    while tm > 8 and _vmem_budget(tm, dim, depth, x_itemsize, out_itemsize,
                                  compute_itemsize) > cap_bytes:
        tm = max(8, _round_up(tm // 2, 8))
    # Prefer an even number of row tiles so the "parallel" axis feeds both v7x cores.
    n = pl.cdiv(rows, tm)
    if n > 1 and n % 2 == 1:
        tm_even = max(8, _round_up(pl.cdiv(rows, n + 1), 8))
        if pl.cdiv(rows, tm_even) % 2 == 0:
            tm = tm_even
    return tm


def base_embedder_forward(x, weights, biases, *, activation="relu",
                          tile_m=None, compute_dtype=jnp.bfloat16, out_dtype=None):
    """x: [B, T, dim]. weights: [depth, dim, dim]. biases: [depth, dim]."""
    B, T, dim = x.shape
    depth = weights.shape[0]
    out_dtype = x.dtype if out_dtype is None else jnp.dtype(out_dtype)
    rows = B * T

    if depth == 0:                      # identity stack -- nothing to fuse
        return x.astype(out_dtype)

    x2d = x.reshape(rows, dim)          # free reshape; no dtype conversion here
    w = weights.astype(compute_dtype)   # small one-time cast; activations dominate HBM
    b3d = biases.reshape(depth, 1, dim).astype(jnp.float32)

    cap = _vmem_cap_bytes()
    c_size = jnp.dtype(compute_dtype).itemsize
    x_size = x2d.dtype.itemsize
    o_size = jnp.dtype(out_dtype).itemsize

    if tile_m is None:
        tile_m = _select_tile_m(rows, dim, depth, cap, x_size, o_size, c_size)
    tile_m = max(8, min(_round_up(tile_m, 8), _round_up(rows, 8)))
    n_tiles = pl.cdiv(rows, tile_m)     # ragged last tile handled by masked store

    budget = _vmem_budget(tile_m, dim, depth, x_size, o_size, c_size)
    vmem_limit = min(cap, max(32 << 20, int(budget * 1.5) + (8 << 20)))

    kernel = functools.partial(_embedder_kernel, depth=depth,
                               activation=activation, compute_dtype=compute_dtype)

    flops = 2 * rows * dim * dim * depth
    transcendentals = rows * dim * depth if activation in ("gelu", "tanh") else 0
    bytes_accessed = (x2d.size * x_size + w.size * c_size + b3d.size * 4
                      + rows * dim * o_size)

    out2d = pl.pallas_call(
        kernel,
        out_shape=jax.ShapeDtypeStruct((rows, dim), out_dtype),
        grid_spec=pltpu.PrefetchScalarGridSpec(
            num_scalar_prefetch=0,
            grid=(n_tiles,),
            in_specs=[
                pl.BlockSpec((tile_m, dim), lambda i: (i, 0)),
                # Constant block index -> DMA'd once; single-buffered since it never changes.
                pl.BlockSpec((depth, dim, dim), lambda i: (0, 0, 0),
                             pipeline_mode=pl.Buffered(1)),
                pl.BlockSpec((depth, 1, dim), lambda i: (0, 0, 0),
                             pipeline_mode=pl.Buffered(1)),
            ],
            out_specs=pl.BlockSpec((tile_m, dim), lambda i: (i, 0)),
        ),
        compiler_params=pltpu.CompilerParams(
            # Row tiles are independent -> shard across both v7x TensorCores.
            dimension_semantics=("parallel",),
            vmem_limit_bytes=vmem_limit,
        ),
        cost_estimate=pl.CostEstimate(
            flops=flops,
            transcendentals=transcendentals,
            bytes_accessed=bytes_accessed),
    )(x2d, w, b3d)

    return out2d.reshape(B, T, dim)


def _reference_f32(x, weights, biases, activation="relu"):
    """Pure-f32 reference for the concretized BaseEmbedder stack (module semantics)."""
    B, T, dim = x.shape
    h = x.reshape(B * T, dim).astype(jnp.float32)
    for layer in range(weights.shape[0]):
        h = _apply_activation(
            h @ weights[layer].astype(jnp.float32)
            + biases[layer].astype(jnp.float32)[None, :], activation)
    return h.reshape(B, T, dim)


def _reference_mixed(x, weights, biases, activation="relu",
                     compute_dtype=jnp.bfloat16, out_dtype=None):
    """Mirrors the kernel's mixed precision exactly (tight-tolerance check)."""
    B, T, dim = x.shape
    out_dtype = x.dtype if out_dtype is None else out_dtype
    depth = weights.shape[0]
    h = x.reshape(B * T, dim).astype(compute_dtype)
    for layer in range(depth):
        acc = jnp.dot(h, weights[layer].astype(compute_dtype),
                      preferred_element_type=jnp.float32)
        acc = acc + biases[layer].astype(jnp.float32)[None, :]
        acc = _apply_activation(acc, activation)
        h = acc if layer + 1 == depth else acc.astype(compute_dtype)
    return h.astype(out_dtype).reshape(B, T, dim)


if __name__ == "__main__":
    dim, depth, activation = 128, 2, "relu"

    key = jax.random.PRNGKey(0)
    kx1, kx2, kw, kb = jax.random.split(key, 4)

    # Deterministic synthetic parameters (no checkpoint loading).
    weights = jax.random.normal(kw, (depth, dim, dim), dtype=jnp.float32) * (dim ** -0.5)
    biases = jax.random.normal(kb, (depth, dim), dtype=jnp.float32) * 0.01

    # Case 1: module's small shape (single row tile).
    x1 = jax.random.normal(kx1, (2, 8, dim), dtype=jnp.float32)
    out1 = jax.block_until_ready(
        base_embedder_forward(x1, weights, biases, activation=activation))
    assert out1.shape == x1.shape and out1.dtype == x1.dtype, (out1.shape, out1.dtype)
    assert jnp.allclose(out1, _reference_mixed(x1, weights, biases, activation),
                        atol=1e-2, rtol=1e-2), "case1 mismatch (mixed-precision ref)"
    assert jnp.allclose(out1, _reference_f32(x1, weights, biases, activation),
                        atol=5e-2, rtol=5e-2), "case1 mismatch (f32 module ref)"

    # Case 2: multi-tile + ragged last tile (rows=1000, tile_m=256 -> grid=(4,),
    # final 232-row tile handled by Pallas' masked partial-block store; no padding).
    x2 = jax.random.normal(kx2, (4, 250, dim), dtype=jnp.float32)
    out2 = jax.block_until_ready(
        base_embedder_forward(x2, weights, biases, activation=activation, tile_m=256))
    assert out2.shape == x2.shape, out2.shape
    assert jnp.allclose(out2, _reference_mixed(x2, weights, biases, activation),
                        atol=1e-2, rtol=1e-2), "case2 mismatch (mixed-precision ref)"
    assert jnp.allclose(out2, _reference_f32(x2, weights, biases, activation),
                        atol=5e-2, rtol=5e-2), "case2 mismatch (f32 module ref)"

    # Case 3: bf16 output path (halves writeback bytes for bf16 consumers).
    out3 = jax.block_until_ready(
        base_embedder_forward(x2, weights, biases, activation=activation,
                              out_dtype=jnp.bfloat16))
    ref3 = _reference_mixed(x2, weights, biases, activation, out_dtype=jnp.bfloat16)
    assert out3.dtype == jnp.bfloat16, out3.dtype
    assert jnp.allclose(out3.astype(jnp.float32), ref3.astype(jnp.float32),
                        atol=2e-2, rtol=2e-2), "case3 mismatch (bf16 output)"

    print("KERNEL_OK")
</pallas_src>

<mosaic_0001>
module attributes {stable_mosaic.version = 11 : i64} {
  func.func @_embedder_kernel(%arg0: i32, %arg1: memref<16x128xf32, #tpu.memory_space<vmem>>, %arg2: memref<2x128x128xbf16, #tpu.memory_space<vmem>>, %arg3: memref<2x1x128xf32, #tpu.memory_space<vmem>>, %arg4: memref<16x128xf32, #tpu.memory_space<vmem>>) attributes {dimension_semantics = [#tpu.dimension_semantics<parallel>], iteration_bounds = array<i64: 1>, scalar_prefetch = 0 : i64, scratch_operands = 0 : i64, tpu.core_type = #tpu.core_type<tc>, window_params = [{transform_indices = @transform_0, window_bounds = array<i64: 16, 128>}, {pipeline_mode = #tpu.pipeline_mode<synchronous>, transform_indices = @transform_1, window_bounds = array<i64: 2, 128, 128>}, {pipeline_mode = #tpu.pipeline_mode<synchronous>, transform_indices = @transform_2, window_bounds = array<i64: 2, 1, 128>}, {transform_indices = @transform_3, window_bounds = array<i64: 16, 128>}]} {
    %c0 = arith.constant 0 : index
    %c0_0 = arith.constant 0 : index
    %0 = vector.load %arg1[%c0, %c0_0] : memref<16x128xf32, #tpu.memory_space<vmem>>, vector<16x128xf32>
    %1 = arith.truncf %0 : vector<16x128xf32> to vector<16x128xbf16>
    %c0_1 = arith.constant 0 : index
    %c0_2 = arith.constant 0 : index
    %c0_3 = arith.constant 0 : index
    %2 = vector.load %arg2[%c0_1, %c0_2, %c0_3] : memref<2x128x128xbf16, #tpu.memory_space<vmem>>, vector<1x128x128xbf16>
    %3 = vector.shape_cast %2 : vector<1x128x128xbf16> to vector<128x128xbf16>
    %cst = arith.constant dense<0.000000e+00> : vector<16x128xf32>
    %4 = tpu.matmul %1, %3, %cst {dimension_numbers = #tpu.dot_dimension_numbers<[1], [0], [0], [1], [0, 0, 1, 1], [], []>} : vector<16x128xbf16>, vector<128x128xbf16>, vector<16x128xf32> -> vector<16x128xf32>
    %c0_4 = arith.constant 0 : index
    %c0_5 = arith.constant 0 : index
    %c0_6 = arith.constant 0 : index
    %5 = vector.load %arg3[%c0_4, %c0_5, %c0_6] : memref<2x1x128xf32, #tpu.memory_space<vmem>>, vector<1x1x128xf32>
    %6 = vector.shape_cast %5 : vector<1x1x128xf32> to vector<1x128xf32>
    %7 = vector.broadcast %6 : vector<1x128xf32> to vector<16x128xf32>
    %8 = arith.addf %4, %7 : vector<16x128xf32>
    %9 = arith.truncf %8 : vector<16x128xf32> to vector<16x128xbf16>
    %cst_7 = arith.constant 0.000000e+00 : bf16
    %10 = vector.broadcast %cst_7 : bf16 to vector<16x128xbf16>
    %11 = arith.maximumf %9, %10 : vector<16x128xbf16>
    %c1 = arith.constant 1 : index
    %c0_8 = arith.constant 0 : index
    %c0_9 = arith.constant 0 : index
    %12 = vector.load %arg2[%c1, %c0_8, %c0_9] : memref<2x128x128xbf16, #tpu.memory_space<vmem>>, vector<1x128x128xbf16>
    %13 = vector.shape_cast %12 : vector<1x128x128xbf16> to vector<128x128xbf16>
    %cst_10 = arith.constant dense<0.000000e+00> : vector<16x128xf32>
    %14 = tpu.matmul %11, %13, %cst_10 {dimension_numbers = #tpu.dot_dimension_numbers<[1], [0], [0], [1], [0, 0, 1, 1], [], []>} : vector<16x128xbf16>, vector<128x128xbf16>, vector<16x128xf32> -> vector<16x128xf32>
    %c1_11 = arith.constant 1 : index
    %c0_12 = arith.constant 0 : index
    %c0_13 = arith.constant 0 : index
    %15 = vector.load %arg3[%c1_11, %c0_12, %c0_13] : memref<2x1x128xf32, #tpu.memory_space<vmem>>, vector<1x1x128xf32>
    %16 = vector.shape_cast %15 : vector<1x1x128xf32> to vector<1x128xf32>
    %17 = vector.broadcast %16 : vector<1x128xf32> to vector<16x128xf32>
    %18 = arith.addf %14, %17 : vector<16x128xf32>
    %cst_14 = arith.constant 0.000000e+00 : f32
    %19 = vector.broadcast %cst_14 : f32 to vector<16x128xf32>
    %20 = arith.maximumf %18, %19 : vector<16x128xf32>
    %c0_15 = arith.constant 0 : index
    %c0_16 = arith.constant 0 : index
    %21 = vector.load %arg4[%c0_15, %c0_16] : memref<16x128xf32, #tpu.memory_space<vmem>>, vector<16x128xf32>
    tpu.vector_store %arg4[%c0_15, %c0_16], %20 {strides = array<i32>} : memref<16x128xf32, #tpu.memory_space<vmem>>, vector<16x128xf32>,
    return
  }
  func.func @transform_0(%arg0: i32) -> (i32, i32) {
    %c0_i32 = arith.constant 0 : i32
    %c0_i32_0 = arith.constant 0 : i32
    return %arg0, %c0_i32 : i32, i32
  }
  func.func @transform_1(%arg0: i32) -> (i32, i32, i32) {
    %c0_i32 = arith.constant 0 : i32
    %c0_i32_0 = arith.constant 0 : i32
    %c0_i32_1 = arith.constant 0 : i32
    %c0_i32_2 = arith.constant 0 : i32
    return %c0_i32, %c0_i32_0, %c0_i32_1 : i32, i32, i32
  }
  func.func @transform_2(%arg0: i32) -> (i32, i32, i32) {
    %c0_i32 = arith.constant 0 : i32
    %c0_i32_0 = arith.constant 0 : i32
    %c0_i32_1 = arith.constant 0 : i32
    %c0_i32_2 = arith.constant 0 : i32
    return %c0_i32, %c0_i32_0, %c0_i32_1 : i32, i32, i32
  }
  func.func @transform_3(%arg0: i32) -> (i32, i32) {
    %c0_i32 = arith.constant 0 : i32
    %c0_i32_0 = arith.constant 0 : i32
    return %arg0, %c0_i32 : i32, i32
  }
}

</mosaic_0001>

<llo_original>
// kernel: tpu_custom_call.1
$region0: #{tpu_custom_call.1}
  #allocation0 [shape = 'u32[]', space=smem, size = 0x4, offset = 0x4, fixed_abs, tag = 'smem constant byte address 0x4 - core index']
  #allocation1 [shape = 'u32[144,128]{1,0:T(1,128)}', space=vmem, size = 0x12000, scoped, tag = 'internal scratch']
  %s0 = inlined_call_operand.hbm [shape: f32[16,128], index: 0, kind: input, shape index: {}]
  %s1 = inlined_call_operand.hbm [shape: bf16[2,128,128], index: 1, kind: input, shape index: {}]
  %s2 = inlined_call_operand.vmem [shape: f32[2,1,128], index: 2, kind: input, shape index: {}]
  %s3 = inlined_call_operand.hbm [shape: f32[16,128], index: 3, kind: output, shape index: {}]
  %s4 = sld [smem:[#allocation0]]
  $region30: #{tpu_custom_call.1} parent=0
    _
  %s6 = ssub.s32 1, %s4
  %s7 = scalar_select 0, %s6, %s4
  $region1: #{tpu_custom_call.1} parent=0
    #allocation2 [shape = 'u8[8192]{0}', space=vmem, size = 0x2000, scoped, tag = 'input window, operand 0, single buffered']
    #allocation3 [shape = 's32[1]{0}', space=sflag, size = 0x4, scoped, tag = 'scoped memory for tpu_custom_call.1']
    #allocation4 [shape = 's32[1]{0}', space=sflag, size = 0x4, scoped, tag = 'scoped memory for tpu_custom_call.1']
    #allocation5 [shape = 'u8[65536]{0}', space=vmem, size = 0x10000, scoped, tag = 'input window, operand 1, single buffered']
    #allocation6 [shape = 's32[1]{0}', space=sflag, size = 0x4, scoped, tag = 'scoped memory for tpu_custom_call.1']
    #allocation7 [shape = 'u8[8192]{0}', space=vmem, size = 0x2000, scoped, tag = 'output window, operand 0, single buffered']
    %8 = vsyncpa [#allocation3], 0
    %9 = vsyncpa [#allocation6], 0
    %10 = vsyncpa [#allocation4], 0
    // Predicated region
    $region2: #{tpu_custom_call.1} parent=1 // pred_check
      _
    $region3: #{tpu_custom_call.1} parent=1 // pred_check_branch
      %12 = sbr.rel (0) target = $region5
    $region4: #{tpu_custom_call.1} parent=1 // pred_region
      %s14 = ssub.s32 256, 256
      %15 = vsyncadd [#allocation3], %s14
      %s16 = sshll.u32 [#allocation2], 4
      %s17 = int_to_ptr.vmem [resolvable:$true] %s16
      %22 = dma.hbm_to_vmem [thread:$0]  %s0, 256, %s17, [#allocation3], 128, 128, 8
    $region5: #{tpu_custom_call.1} parent=1 // pred_fallthru
      _
    // Predicated region
    $region6: #{tpu_custom_call.1} parent=1 // pred_check
      _
    $region7: #{tpu_custom_call.1} parent=1 // pred_check_branch
      %24 = sbr.rel (0) target = $region9
    $region8: #{tpu_custom_call.1} parent=1 // pred_region
      %s26 = ssub.s32 2048, 2048
      %27 = vsyncadd [#allocation6], %s26
      %s28 = sshll.u32 [#allocation5], 4
      %s29 = int_to_ptr.vmem [resolvable:$true] %s28
      %34 = dma.hbm_to_vmem [thread:$0]  %s1, 2048, %s29, [#allocation6], 64, 64, 4
    $region9: #{tpu_custom_call.1} parent=1 // pred_fallthru
      _
    // Predicated region
    $region10: #{tpu_custom_call.1} parent=1 // pred_check
      _
    $region11: #{tpu_custom_call.1} parent=1 // pred_check_branch
      %36 = sbr.rel (0) target = $region13
    $region12: #{tpu_custom_call.1} parent=1 // pred_region
      _
    $region13: #{tpu_custom_call.1} parent=1 // pred_fallthru
      _
    // Predicated region
    $region14: #{tpu_custom_call.1} parent=1 // pred_check
      _
    $region15: #{tpu_custom_call.1} parent=1 // pred_check_branch
      %38 = sbr.rel (0) target = $region17
    $region16: #{tpu_custom_call.1} parent=1 // pred_region
      %39 = dma.done [#allocation3], 256
    $region17: #{tpu_custom_call.1} parent=1 // pred_fallthru
      _
    // Predicated region
    $region18: #{tpu_custom_call.1} parent=1 // pred_check
      _
    $region19: #{tpu_custom_call.1} parent=1 // pred_check_branch
      %41 = sbr.rel (0) target = $region21
    $region20: #{tpu_custom_call.1} parent=1 // pred_region
      %42 = dma.done [#allocation6], 2048
    $region21: #{tpu_custom_call.1} parent=1 // pred_fallthru
      _
    %v44 = vld [vmem:[#allocation2] sm:$0xff]
    %v45 = vld [vmem:[#allocation2 + $0x8] sm:$0xff]
    %v46 = vpack.c.bf16 %v45, %v44
    %v47 = vld [vmem:[#allocation5] sm:$0xf]
    %v48 = vld [vmem:[#allocation5 + $0x4] sm:$0xf]
    %v49 = vld [vmem:[#allocation5 + $0x8] sm:$0xf]
    %v50 = vld [vmem:[#allocation5 + $0xc] sm:$0xf]
    %v51 = vld [vmem:[#allocation5 + $0x10] sm:$0xf]
    %v52 = vld [vmem:[#allocation5 + $0x14] sm:$0xf]
    %v53 = vld [vmem:[#allocation5 + $0x18] sm:$0xf]
    %v54 = vld [vmem:[#allocation5 + $0x1c] sm:$0xf]
    %v55 = vld [vmem:[#allocation5 + $0x20] sm:$0xf]
    %v56 = vld [vmem:[#allocation5 + $0x24] sm:$0xf]
    %v57 = vld [vmem:[#allocation5 + $0x28] sm:$0xf]
    %v58 = vld [vmem:[#allocation5 + $0x2c] sm:$0xf]
    %v59 = vld [vmem:[#allocation5 + $0x30] sm:$0xf]
    %v60 = vld [vmem:[#allocation5 + $0x34] sm:$0xf]
    %v61 = vld [vmem:[#allocation5 + $0x38] sm:$0xf]
    %v62 = vld [vmem:[#allocation5 + $0x3c] sm:$0xf]
    %v63 = vld [vmem:[%s2] sm:$0x1]
    %v65 = vlaneseq
    %v66 = vshrl.u32 %v65, 7
    %v67 = vsub.s32 0, %v66
    %v68 = vrot.slane %v63, %v67
    %v86 = vunpack.c.l.b16 %v47
    %v87 = vunpack.c.l.b16 %v48
    %v88 = vunpack.c.l.b16 %v49
    %v89 = vunpack.c.l.b16 %v50
    %v90 = vunpack.c.l.b16 %v51
    %v91 = vunpack.c.l.b16 %v52
    %v92 = vunpack.c.l.b16 %v53
    %v93 = vunpack.c.l.b16 %v54
    %v94 = vunpack.c.l.b16 %v55
    %v95 = vunpack.c.l.b16 %v56
    %v96 = vunpack.c.l.b16 %v57
    %v97 = vunpack.c.l.b16 %v58
    %v98 = vunpack.c.l.b16 %v59
    %v99 = vunpack.c.l.b16 %v60
    %v100 = vunpack.c.l.b16 %v61
    %v101 = vunpack.c.l.b16 %v62
    %v102 = vpack.c.b16 %v87, %v86
    %v103 = vpack.c.b16 %v89, %v88
    %v104 = vpack.c.b16 %v91, %v90
    %v105 = vpack.c.b16 %v93, %v92
    %v106 = vpack.c.b16 %v95, %v94
    %v107 = vpack.c.b16 %v97, %v96
    %v108 = vpack.c.b16 %v99, %v98
    %v109 = vpack.c.b16 %v101, %v100
    %118 = vmatprep.subr.bf16.mxu0 0
    %119 = vmatpush1.bf16.msra.mxu0 %v102
    %120 = vmatprep.subr.bf16.mxu0 0
    %121 = vmatpush1.bf16.msra.mxu0 %v103
    %122 = vmatprep.subr.bf16.mxu0 0
    %123 = vmatpush1.bf16.msra.mxu0 %v104
    %124 = vmatprep.subr.bf16.mxu0 0
    %125 = vmatpush1.bf16.msra.mxu0 %v105
    %126 = vmatprep.subr.bf16.mxu0 0
    %127 = vmatpush1.bf16.msra.mxu0 %v106
    %128 = vmatprep.subr.bf16.mxu0 0
    %129 = vmatpush1.bf16.msra.mxu0 %v107
    %130 = vmatprep.subr.bf16.mxu0 0
    %131 = vmatpush1.bf16.msra.mxu0 %v108
    %132 = vmatprep.subr.bf16.mxu0 0
    %133 = vmatpush1.bf16.msra.mxu0 %v109
    %134 = vmatprep.subr.bf16.mxu0 0
    %135 = vmatpush1.bf16.msra.mxu0 0
    %136 = vmatprep.subr.bf16.mxu0 0
    %137 = vmatpush1.bf16.msra.mxu0 0
    %138 = vmatprep.subr.bf16.mxu0 0
    %139 = vmatpush1.bf16.msra.mxu0 0
    %140 = vmatprep.subr.bf16.mxu0 0
    %141 = vmatpush1.bf16.msra.mxu0 0
    %142 = vmatprep.subr.bf16.mxu0 0
    %143 = vmatpush1.bf16.msra.mxu0 0
    %144 = vmatprep.subr.bf16.mxu0 0
    %145 = vmatpush1.bf16.msra.mxu0 0
    %146 = vmatprep.subr.bf16.mxu0 0
    %147 = vmatpush1.bf16.msra.mxu0 0
    %148 = vmatprep.subr.bf16.mxu0 0
    %149 = vmatpush1.bf16.msra.mxu0 0
    %150 = vmatprep.mubr.bf16.mxu0 0
    %151 = vmatmul.mubr.bf16.gmra.mrb[0].mxu0 %v46
    %v152 = vpop.f32.mrb[0].mxu0
    %v153 = vadd.f32 %v68, %v152
    %v154 = vpop.f32.mrb[0].mxu0
    %v155 = vpop.f32.mrb[0].mxu0
    %v156 = vadd.f32 %v68, %v155
    %v157 = vpop.f32.mrb[0].mxu0
    %158 = vdwg.mxu0
    %v159 = vpack.c.bf16 %v156, %v153
    %v160 = vmax.bf16 %v159, 0
    %s161 = scalar_lea.vmem [#allocation5], 64
    %v162 = vld [vmem:[%s161] sm:$0xf]
    %v163 = vld [vmem:[%s161 + $0x4] sm:$0xf]
    %v164 = vld [vmem:[%s161 + $0x8] sm:$0xf]
    %v165 = vld [vmem:[%s161 + $0xc] sm:$0xf]
    %v166 = vld [vmem:[%s161 + $0x10] sm:$0xf]
    %v167 = vld [vmem:[%s161 + $0x14] sm:$0xf]
    %v168 = vld [vmem:[%s161 + $0x18] sm:$0xf]
    %v169 = vld [vmem:[%s161 + $0x1c] sm:$0xf]
    %v170 = vld [vmem:[%s161 + $0x20] sm:$0xf]
    %v171 = vld [vmem:[%s161 + $0x24] sm:$0xf]
    %v172 = vld [vmem:[%s161 + $0x28] sm:$0xf]
    %v173 = vld [vmem:[%s161 + $0x2c] sm:$0xf]
    %v174 = vld [vmem:[%s161 + $0x30] sm:$0xf]
    %v175 = vld [vmem:[%s161 + $0x34] sm:$0xf]
    %v176 = vld [vmem:[%s161 + $0x38] sm:$0xf]
    %v177 = vld [vmem:[%s161 + $0x3c] sm:$0xf]
    %s178 = scalar_lea.vmem %s2, 1
    %v179 = vld [vmem:[%s178] sm:$0x1]
    %v181 = vlaneseq
    %v182 = vshrl.u32 %v181, 7
    %v183 = vsub.s32 0, %v182
    %v184 = vrot.slane %v179, %v183
    %v202 = vunpack.c.l.b16 %v162
    %v203 = vunpack.c.l.b16 %v163
    %v204 = vunpack.c.l.b16 %v164
    %v205 = vunpack.c.l.b16 %v165
    %v206 = vunpack.c.l.b16 %v166
    %v207 = vunpack.c.l.b16 %v167
    %v208 = vunpack.c.l.b16 %v168
    %v209 = vunpack.c.l.b16 %v169
    %v210 = vunpack.c.l.b16 %v170
    %v211 = vunpack.c.l.b16 %v171
    %v212 = vunpack.c.l.b16 %v172
    %v213 = vunpack.c.l.b16 %v173
    %v214 = vunpack.c.l.b16 %v174
    %v215 = vunpack.c.l.b16 %v175
    %v216 = vunpack.c.l.b16 %v176
    %v217 = vunpack.c.l.b16 %v177
    %v218 = vpack.c.b16 %v203, %v202
    %v219 = vpack.c.b16 %v205, %v204
    %v220 = vpack.c.b16 %v207, %v206
    %v221 = vpack.c.b16 %v209, %v208
    %v222 = vpack.c.b16 %v211, %v210
    %v223 = vpack.c.b16 %v213, %v212
    %v224 = vpack.c.b16 %v215, %v214
    %v225 = vpack.c.b16 %v217, %v216
    %234 = vmatprep.subr.bf16.mxu0 0
    %235 = vmatpush1.bf16.msra.mxu0 %v218
    %236 = vmatprep.subr.bf16.mxu0 0
    %237 = vmatpush1.bf16.msra.mxu0 %v219
    %238 = vmatprep.subr.bf16.mxu0 0
    %239 = vmatpush1.bf16.msra.mxu0 %v220
    %240 = vmatprep.subr.bf16.mxu0 0
    %241 = vmatpush1.bf16.msra.mxu0 %v221
    %242 = vmatprep.subr.bf16.mxu0 0
    %243 = vmatpush1.bf16.msra.mxu0 %v222
    %244 = vmatprep.subr.bf16.mxu0 0
    %245 = vmatpush1.bf16.msra.mxu0 %v223
    %246 = vmatprep.subr.bf16.mxu0 0
    %247 = vmatpush1.bf16.msra.mxu0 %v224
    %248 = vmatprep.subr.bf16.mxu0 0
    %249 = vmatpush1.bf16.msra.mxu0 %v225
    %250 = vmatprep.subr.bf16.mxu0 0
    %251 = vmatpush1.bf16.msra.mxu0 0
    %252 = vmatprep.subr.bf16.mxu0 0
    %253 = vmatpush1.bf16.msra.mxu0 0
    %254 = vmatprep.subr.bf16.mxu0 0
    %255 = vmatpush1.bf16.msra.mxu0 0
    %256 = vmatprep.subr.bf16.mxu0 0
    %257 = vmatpush1.bf16.msra.mxu0 0
    %258 = vmatprep.subr.bf16.mxu0 0
    %259 = vmatpush1.bf16.msra.mxu0 0
    %260 = vmatprep.subr.bf16.mxu0 0
    %261 = vmatpush1.bf16.msra.mxu0 0
    %262 = vmatprep.subr.bf16.mxu0 0
    %263 = vmatpush1.bf16.msra.mxu0 0
    %264 = vmatprep.subr.bf16.mxu0 0
    %265 = vmatpush1.bf16.msra.mxu0 0
    %266 = vmatprep.mubr.bf16.mxu0 0
    %267 = vmatmul.mubr.bf16.gmra.mrb[0].mxu0 %v160
    %v268 = vpop.f32.mrb[0].mxu0
    %v269 = vadd.f32 %v184, %v268
    %v270 = vpop.f32.mrb[0].mxu0
    %v271 = vpop.f32.mrb[0].mxu0
    %v272 = vadd.f32 %v184, %v271
    %v273 = vpop.f32.mrb[0].mxu0
    %274 = vdwg.mxu0
    %v275 = vmax.f32 %v269, 0.0
    %v276 = vmax.f32 %v272, 0.0
    %277 = vst [vmem:[#allocation7] sm:$0xff] %v275
    %278 = vst [vmem:[#allocation7 + $0x8] sm:$0xff] %v276
    // Predicated region
    $region22: #{tpu_custom_call.1} parent=1 // pred_check
      _
    $region23: #{tpu_custom_call.1} parent=1 // pred_check_branch
      %280 = sbr.rel (0) target = $region25
    $region24: #{tpu_custom_call.1} parent=1 // pred_region
      %s282 = ssub.s32 256, 256
      %283 = vsyncadd [#allocation4], %s282
      %s284 = sshll.u32 [#allocation7], 4
      %s285 = int_to_ptr.vmem [resolvable:$true] %s284
      %290 = dma.vmem_to_hbm [thread:$0]  %s285, 256, %s3, [#allocation4], 128, 128, 8
    $region25: #{tpu_custom_call.1} parent=1 // pred_fallthru
      _
    // Predicated region
    $region26: #{tpu_custom_call.1} parent=1 // pred_check
      _
    $region27: #{tpu_custom_call.1} parent=1 // pred_check_branch
      %292 = sbr.rel (0) target = $region29
    $region28: #{tpu_custom_call.1} parent=1 // pred_region
      %293 = dma.done [#allocation4], 256
    $region29: #{tpu_custom_call.1} parent=1 // pred_fallthru
      _
    %294 = vsyncpa [#allocation3], 1
    %295 = vsyncpa [#allocation6], 1
    %296 = vsyncpa [#allocation4], 1

</llo_original>
